<compile_context>
chip_gen: v7x
topology: tpu7x:2x2x1
jax: 0.10.0
libtpu: 0.0.40
codegen_flags: <defaults>
</compile_context>

<pallas_src>
import jax
import jax.numpy as jnp
from jax.experimental import pallas as pl
from jax.experimental.pallas import tpu as pltpu


def _mul_kernel(x_ref, y_ref, o_ref):
    # x_ref / o_ref: (1, cg, 3, hw_t)    y_ref: (1, cg, 1, hw_t)
    # Broadcasting y over the size-3 axis IS repeat_interleave(y, 3, dim=1):
    # each y channel row is reused for its 3 consecutive x channels without
    # being re-read from HBM.  Single multiply + single store per vreg -- no
    # extra temporaries (keeps the lone v5e store slot the only vector cost).
    o_ref[...] = x_ref[...] * y_ref[...]


# Explicit scoped-VMEM limit: above the 16 MiB (v5e) / 32 MiB (v6e, v7x)
# defaults, below v7x's 64 MiB physical.  Working-set budget leaves headroom.
_VMEM_LIMIT_BYTES = 48 * 1024 * 1024
_VMEM_STEP_BUDGET = 40 * 1024 * 1024


def _pick_tiles(Cy, HW, itemsize, budget_bytes):
    """Largest (channel_group, spatial_tile) whose double-buffered set fits."""

    def step_bytes(cg, hw_t):
        # x + y + out blocks; the size-3 / size-1 second-minor dim pads to 8
        # sublanes in VMEM; x2 for the pipeline's double buffering.
        return 2 * 3 * cg * 8 * hw_t * itemsize

    for cg in sorted((d for d in range(1, Cy + 1) if Cy % d == 0), reverse=True):
        if step_bytes(cg, HW) <= budget_bytes:
            return cg, HW
    # Even a single channel group is too large: tile the lane-dense spatial axis.
    if HW % 128 == 0:
        for hw_t in sorted((d for d in range(128, HW, 128) if HW % d == 0),
                           reverse=True):
            if step_bytes(1, hw_t) <= budget_bytes:
                return 1, hw_t
    # TODO(synk): feature maps whose H*W is not a multiple of 128 and do not
    # fit VMEM would need padded/uneven-tail tiling; never hit at demo sizes.
    return 1, HW


def multiply_layer1(x, y):
    """Pallas equivalent of: x * torch.repeat_interleave(y, 3, dim=1) (NCHW)."""
    B, Cx, H, W = x.shape
    By, Cy, Hy, Wy = y.shape
    assert B == By and H == Hy and W == Wy, "batch/spatial dims must match"
    assert Cx == 3 * Cy, "x channels must be 3x y channels"
    assert x.dtype == y.dtype, "x/y dtypes must match (no implicit promotion)"

    HW = H * W
    # Free row-major reshapes (no data movement): expose the repeat axis (3)
    # explicitly and make the last axis the flattened, lane-dense H*W.
    x4 = x.reshape(B, Cy, 3, HW)
    y4 = y.reshape(B, Cy, 1, HW)

    cg, hw_t = _pick_tiles(Cy, HW, x.dtype.itemsize, _VMEM_STEP_BUDGET)
    grid = (B, Cy // cg, HW // hw_t)

    out = pl.pallas_call(
        _mul_kernel,
        out_shape=jax.ShapeDtypeStruct((B, Cy, 3, HW), x.dtype),
        grid=grid,
        in_specs=[
            pl.BlockSpec((1, cg, 3, hw_t), lambda b, c, s: (b, c, 0, s)),
            pl.BlockSpec((1, cg, 1, hw_t), lambda b, c, s: (b, c, 0, s)),
        ],
        out_specs=pl.BlockSpec((1, cg, 3, hw_t), lambda b, c, s: (b, c, 0, s)),
        compiler_params=pltpu.CompilerParams(
            # All axes are independent -> megacore/2-TC sharding is free.
            dimension_semantics=("parallel", "parallel", "parallel"),
            vmem_limit_bytes=_VMEM_LIMIT_BYTES,
        ),
    )(x4, y4)
    return out.reshape(B, Cx, H, W)


if __name__ == "__main__":
    key = jax.random.PRNGKey(0)
    kx, ky = jax.random.split(key)

    B, Cy, H, W = 2, 4, 16, 16
    Cx = 3 * Cy
    x = jax.random.normal(kx, (B, Cx, H, W), dtype=jnp.float32)
    y = jax.random.normal(ky, (B, Cy, H, W), dtype=jnp.float32)

    out = jax.block_until_ready(multiply_layer1(x, y))

    # Pure-JAX reference of the PyTorch semantics.
    ref = x * jnp.repeat(y, 3, axis=1)
    assert out.shape == ref.shape and out.dtype == ref.dtype
    assert jnp.allclose(out, ref, atol=1e-6, rtol=1e-6)

    print("KERNEL_OK")
</pallas_src>

<mosaic_0001>
module attributes {stable_mosaic.version = 11 : i64} {
  func.func @_mul_kernel(%arg0: i32, %arg1: i32, %arg2: i32, %arg3: memref<1x4x3x256xf32, #tpu.memory_space<vmem>>, %arg4: memref<1x4x1x256xf32, #tpu.memory_space<vmem>>, %arg5: memref<1x4x3x256xf32, #tpu.memory_space<vmem>>) attributes {dimension_semantics = [#tpu.dimension_semantics<parallel>, #tpu.dimension_semantics<parallel>, #tpu.dimension_semantics<parallel>], iteration_bounds = array<i64: 2, 1, 1>, scalar_prefetch = 0 : i64, scratch_operands = 0 : i64, tpu.core_type = #tpu.core_type<tc>, window_params = [{transform_indices = @transform_0, window_bounds = array<i64: 1, 4, 3, 256>}, {transform_indices = @transform_1, window_bounds = array<i64: 1, 4, 1, 256>}, {transform_indices = @transform_2, window_bounds = array<i64: 1, 4, 3, 256>}]} {
    %c0 = arith.constant 0 : index
    %c0_0 = arith.constant 0 : index
    %c0_1 = arith.constant 0 : index
    %c0_2 = arith.constant 0 : index
    %0 = vector.load %arg3[%c0, %c0_0, %c0_1, %c0_2] : memref<1x4x3x256xf32, #tpu.memory_space<vmem>>, vector<1x4x3x256xf32>
    %c0_3 = arith.constant 0 : index
    %c0_4 = arith.constant 0 : index
    %c0_5 = arith.constant 0 : index
    %c0_6 = arith.constant 0 : index
    %1 = vector.load %arg4[%c0_3, %c0_4, %c0_5, %c0_6] : memref<1x4x1x256xf32, #tpu.memory_space<vmem>>, vector<1x4x1x256xf32>
    %2 = vector.broadcast %1 : vector<1x4x1x256xf32> to vector<1x4x3x256xf32>
    %3 = arith.mulf %0, %2 : vector<1x4x3x256xf32>
    %c0_7 = arith.constant 0 : index
    %c0_8 = arith.constant 0 : index
    %c0_9 = arith.constant 0 : index
    %c0_10 = arith.constant 0 : index
    %4 = vector.load %arg5[%c0_7, %c0_8, %c0_9, %c0_10] : memref<1x4x3x256xf32, #tpu.memory_space<vmem>>, vector<1x4x3x256xf32>
    tpu.vector_store %arg5[%c0_7, %c0_8, %c0_9, %c0_10], %3 {strides = array<i32>} : memref<1x4x3x256xf32, #tpu.memory_space<vmem>>, vector<1x4x3x256xf32>,
    return
  }
  func.func @transform_0(%arg0: i32, %arg1: i32, %arg2: i32) -> (i32, i32, i32, i32) {
    %c0_i32 = arith.constant 0 : i32
    %c0_i32_0 = arith.constant 0 : i32
    return %arg0, %arg1, %c0_i32, %arg2 : i32, i32, i32, i32
  }
  func.func @transform_1(%arg0: i32, %arg1: i32, %arg2: i32) -> (i32, i32, i32, i32) {
    %c0_i32 = arith.constant 0 : i32
    %c0_i32_0 = arith.constant 0 : i32
    return %arg0, %arg1, %c0_i32, %arg2 : i32, i32, i32, i32
  }
  func.func @transform_2(%arg0: i32, %arg1: i32, %arg2: i32) -> (i32, i32, i32, i32) {
    %c0_i32 = arith.constant 0 : i32
    %c0_i32_0 = arith.constant 0 : i32
    return %arg0, %arg1, %c0_i32, %arg2 : i32, i32, i32, i32
  }
}

</mosaic_0001>

<llo_original>
// kernel: tpu_custom_call.1
$region0: #{tpu_custom_call.1}
  #allocation0 [shape = 'u32[]', space=smem, size = 0x4, offset = 0x4, fixed_abs, tag = 'smem constant byte address 0x4 - core index']
  #allocation1 [shape = 'u32[144,128]{1,0:T(1,128)}', space=vmem, size = 0x12000, scoped, tag = 'internal scratch']
  %s0 = inlined_call_operand.vmem [shape: f32[2,4,3,256], index: 0, kind: input, shape index: {}]
  %s1 = inlined_call_operand.vmem [shape: f32[2,4,1,256], index: 1, kind: input, shape index: {}]
  %s2 = inlined_call_operand.vmem [shape: f32[2,4,3,256], index: 2, kind: output, shape index: {}]
  %s3 = sld [smem:[#allocation0]]
  $region41: #{tpu_custom_call.1} parent=0
    _
  %s5 = ssub.s32 1, %s3
  %s6 = scalar_select 0, %s5, %s3
  loop: start=0, step=1, limit=4
  $region2: #{tpu_custom_call.1} parent=0 // loop_pre_header
    _
  $region3: #{tpu_custom_call.1} parent=0 // loop_header
    %s8 = sphi 0, %s12
    %p9 = scmp.ge.s32.totalorder %s8, 4
    %s15 = sphi 0, %s34
    %s16 = sphi 0, %s30
    %s17 = sphi 0, %s26
    %s18 = sphi 0, %s15
    %s19 = sphi 0, %s16
    %s20 = sphi 0, %s17
    %s21 = sphi 0, %s18
    %s22 = sphi 0, %s19
    %s23 = sphi 0, %s20
    %s41 = sphi 0, %s43
    %s44 = sphi 0, %s41
    %s45 = sphi 0, %s44
    %s61 = sphi 0, %s45
    %s71 = sphi 0, %s73
    %s74 = sphi 0, %s71
    %s75 = sphi 0, %s74
    %s91 = sphi 0, %s75
    %s101 = sphi 0, %s103
    %s104 = sphi 0, %s101
    %s105 = sphi 0, %s104
    %s121 = sphi 0, %s105
  $region4: #{tpu_custom_call.1} parent=0 // loop_header_branch
    %11 = sbr.rel (%p9) target = $region8
  $region5: #{tpu_custom_call.1} parent=0 // loop_body
    %s13 = ssub.s32 %s8, 1
    %s14 = ssub.s32 %s8, 2
    %s24 = sadd.s32 1, %s17
    %p25 = scmp.ge.s32.totalorder %s24, 1
    %s26 = scalar_select %p25, 0, %s24
    %s27 = sadd.s32 1, %s16
    %s28 = scalar_select %p25, %s27, %s16
    %p29 = scmp.ge.s32.totalorder %s28, 1
    %s30 = scalar_select %p29, 0, %s28
    %s31 = sadd.s32 1, %s15
    %s32 = scalar_select %p29, %s31, %s15
    %p33 = scmp.ge.s32.totalorder %s32, 2
    %s34 = scalar_select %p33, 0, %s32
    %s35 = ssub.s32 %s15, %s34
    %s36 = ssub.s32 %s16, %s30
    %s37 = sor.u32 %s35, %s36
    %s38 = ssub.s32 %s17, %s26
    %s39 = sor.u32 %s37, %s38
    %p40 = scmp.eq.s32.totalorder %s39, 0
    %s42 = sadd.s32 %s41, 1
    %s43 = scalar_select %p40, %s41, %s42
    %p46 = pneg %p40
    %p47 = scmp.eq.s32.totalorder %s8, 1
    %p48 = por %p46, %p47
    %p49 = scmp.ne.s32.totalorder %s41, %s44
    %p50 = scmp.eq.s32.totalorder %s8, 0
    %p51 = por %p49, %p50
    %p52 = scmp.ne.s32.totalorder %s41, %s44
    %p53 = scmp.eq.s32.totalorder %s13, 1
    %p54 = por %p52, %p53
    %p55 = scmp.ne.s32.totalorder %s44, %s45
    %p56 = scmp.eq.s32.totalorder %s13, 0
    %p57 = por %p55, %p56
    %p58 = scmp.ne.s32.totalorder %s44, %s45
    %p59 = scmp.eq.s32.totalorder %s14, 1
    %p60 = por %p58, %p59
    %p62 = scmp.ne.s32.totalorder %s45, %s61
    %p63 = scmp.eq.s32.totalorder %s14, 0
    %p64 = por %p62, %p63
    %s65 = ssub.s32 %s15, %s34
    %s66 = ssub.s32 %s16, %s30
    %s67 = sor.u32 %s65, %s66
    %s68 = ssub.s32 %s17, %s26
    %s69 = sor.u32 %s67, %s68
    %p70 = scmp.eq.s32.totalorder %s69, 0
    %s72 = sadd.s32 %s71, 1
    %s73 = scalar_select %p70, %s71, %s72
    %p76 = pneg %p70
    %p77 = scmp.eq.s32.totalorder %s8, 1
    %p78 = por %p76, %p77
    %p79 = scmp.ne.s32.totalorder %s71, %s74
    %p80 = scmp.eq.s32.totalorder %s8, 0
    %p81 = por %p79, %p80
    %p82 = scmp.ne.s32.totalorder %s71, %s74
    %p83 = scmp.eq.s32.totalorder %s13, 1
    %p84 = por %p82, %p83
    %p85 = scmp.ne.s32.totalorder %s74, %s75
    %p86 = scmp.eq.s32.totalorder %s13, 0
    %p87 = por %p85, %p86
    %p88 = scmp.ne.s32.totalorder %s74, %s75
    %p89 = scmp.eq.s32.totalorder %s14, 1
    %p90 = por %p88, %p89
    %p92 = scmp.ne.s32.totalorder %s75, %s91
    %p93 = scmp.eq.s32.totalorder %s14, 0
    %p94 = por %p92, %p93
    %s95 = ssub.s32 %s15, %s34
    %s96 = ssub.s32 %s16, %s30
    %s97 = sor.u32 %s95, %s96
    %s98 = ssub.s32 %s17, %s26
    %s99 = sor.u32 %s97, %s98
    %p100 = scmp.eq.s32.totalorder %s99, 0
    %s102 = sadd.s32 %s101, 1
    %s103 = scalar_select %p100, %s101, %s102
    %p106 = pneg %p100
    %p107 = scmp.eq.s32.totalorder %s8, 1
    %p108 = por %p106, %p107
    %p109 = scmp.ne.s32.totalorder %s101, %s104
    %p110 = scmp.eq.s32.totalorder %s8, 0
    %p111 = por %p109, %p110
    %p112 = scmp.ne.s32.totalorder %s101, %s104
    %p113 = scmp.eq.s32.totalorder %s13, 1
    %p114 = por %p112, %p113
    %p115 = scmp.ne.s32.totalorder %s104, %s105
    %p116 = scmp.eq.s32.totalorder %s13, 0
    %p117 = por %p115, %p116
    %p118 = scmp.ne.s32.totalorder %s104, %s105
    %p119 = scmp.eq.s32.totalorder %s14, 1
    %p120 = por %p118, %p119
    %p122 = scmp.ne.s32.totalorder %s105, %s121
    %p123 = scmp.eq.s32.totalorder %s14, 0
    %p124 = por %p122, %p123
    %p125 = scmp.le.s32.totalorder 1, %s8
    %p126 = scmp.lt.s32.totalorder %s8, 3
    %p127 = pnand %p125, %p126
    %p128 = pneg %p127
    // Predicated region
    $region9: #{tpu_custom_call.1} parent=5 // pred_check
      _
    $region10: #{tpu_custom_call.1} parent=5 // pred_check_branch
      %130 = sbr.rel (%p127) target = $region12
    $region11: #{tpu_custom_call.1} parent=5 // pred_region
      %s131 = ssub.s32 %s8, 1
    $region12: #{tpu_custom_call.1} parent=5 // pred_fallthru
      _
    %p132 = scmp.lt.s32.totalorder %s8, 2
    // Predicated region
    $region13: #{tpu_custom_call.1} parent=5 // pred_check
      %p133 = pneg %p132
    $region14: #{tpu_custom_call.1} parent=5 // pred_check_branch
      %135 = sbr.rel (%p133) target = $region16
    $region15: #{tpu_custom_call.1} parent=5 // pred_region
      // Predicated region
      $region17: #{tpu_custom_call.1} parent=15 // pred_check
        %p136 = pneg %p51
      $region18: #{tpu_custom_call.1} parent=15 // pred_check_branch
        %138 = sbr.rel (%p136) target = $region20
      $region19: #{tpu_custom_call.1} parent=15 // pred_region
        %s139 = smul.u32 4, %s16
        %s140 = smul.u32 2, %s17
        %p141 = scmp.lt.s32.totalorder %s15, 1
        %s142 = scalar_select %p141, %s15, 1
        %p143 = scmp.lt.s32.totalorder %s139, 3
        %s144 = scalar_select %p143, %s139, 3
        %p145 = scmp.lt.s32.totalorder %s140, 1
        %s146 = scalar_select %p145, %s140, 1
        %s147 = smul.addr %s144, 2
        %s148 = sadd.s32 %s146, %s147
        %s149 = smul.addr %s142, 8
        %s150 = sadd.s32 %s148, %s149
        %s151 = smul.addr %s150, 4
        %s152 = scalar_lea.vmem %s0, %s151
        %s153 = smul.u32 4, %s16
        %s154 = smul.u32 2, %s17
      $region20: #{tpu_custom_call.1} parent=15 // pred_fallthru
        _
      // Predicated region
      $region21: #{tpu_custom_call.1} parent=15 // pred_check
        %p155 = pneg %p81
      $region22: #{tpu_custom_call.1} parent=15 // pred_check_branch
        %157 = sbr.rel (%p155) target = $region24
      $region23: #{tpu_custom_call.1} parent=15 // pred_region
        %s158 = smul.u32 4, %s16
        %s159 = smul.u32 2, %s17
        %p160 = scmp.lt.s32.totalorder %s15, 1
        %s161 = scalar_select %p160, %s15, 1
        %p162 = scmp.lt.s32.totalorder %s158, 3
        %s163 = scalar_select %p162, %s158, 3
        %p164 = scmp.lt.s32.totalorder %s159, 1
        %s165 = scalar_select %p164, %s159, 1
        %s166 = smul.addr %s163, 2
        %s167 = sadd.s32 %s165, %s166
        %s168 = smul.addr %s161, 8
        %s169 = sadd.s32 %s167, %s168
        %s170 = scalar_lea.vmem %s1, %s169
        %s171 = smul.u32 4, %s16
        %s172 = smul.u32 2, %s17
      $region24: #{tpu_custom_call.1} parent=15 // pred_fallthru
        _
    $region16: #{tpu_custom_call.1} parent=5 // pred_fallthru
      _
    %p173 = scmp.le.s32.totalorder 1, %s8
    %p174 = scmp.lt.s32.totalorder %s8, 3
    %p175 = pnand %p173, %p174
    %p176 = pneg %p175
    // Predicated region
    $region25: #{tpu_custom_call.1} parent=5 // pred_check
      _
    $region26: #{tpu_custom_call.1} parent=5 // pred_check_branch
      %178 = sbr.rel (%p175) target = $region28
    $region27: #{tpu_custom_call.1} parent=5 // pred_region
      %s179 = ssub.s32 %s8, 1
      %s180 = smul.u32 4, %s19
      %s181 = smul.u32 2, %s20
      %p182 = scmp.lt.s32.totalorder %s18, 1
      %s183 = scalar_select %p182, %s18, 1
      %p184 = scmp.lt.s32.totalorder %s180, 3
      %s185 = scalar_select %p184, %s180, 3
      %p186 = scmp.lt.s32.totalorder %s181, 1
      %s187 = scalar_select %p186, %s181, 1
      %s188 = smul.addr %s185, 2
      %s189 = sadd.s32 %s187, %s188
      %s190 = smul.addr %s183, 8
      %s191 = sadd.s32 %s189, %s190
      %s192 = smul.addr %s191, 4
      %s193 = scalar_lea.vmem %s0, %s192
      %p194 = pneg %p57
      %p195 = pneg %p54
      %s196 = smul.u32 4, %s19
      %s197 = smul.u32 2, %s20
      %p198 = scmp.lt.s32.totalorder %s18, 1
      %s199 = scalar_select %p198, %s18, 1
      %p200 = scmp.lt.s32.totalorder %s196, 3
      %s201 = scalar_select %p200, %s196, 3
      %p202 = scmp.lt.s32.totalorder %s197, 1
      %s203 = scalar_select %p202, %s197, 1
      %s204 = smul.addr %s201, 2
      %s205 = sadd.s32 %s203, %s204
      %s206 = smul.addr %s199, 8
      %s207 = sadd.s32 %s205, %s206
      %s208 = scalar_lea.vmem %s1, %s207
      %p209 = pneg %p87
      %p210 = pneg %p84
      %p211 = pneg %p117
      %p212 = pneg %p114
      %s213 = smul.u32 4, %s19
      %s214 = smul.u32 2, %s20
      %p215 = scmp.lt.s32.totalorder %s18, 1
      %s216 = scalar_select %p215, %s18, 1
      %p217 = scmp.lt.s32.totalorder %s213, 3
      %s218 = scalar_select %p217, %s213, 3
      %p219 = scmp.lt.s32.totalorder %s214, 1
      %s220 = scalar_select %p219, %s214, 1
      %s221 = smul.addr %s218, 2
      %s222 = sadd.s32 %s220, %s221
      %s223 = smul.addr %s216, 8
      %s224 = sadd.s32 %s222, %s223
      %s225 = smul.addr %s224, 4
      %s226 = scalar_lea.vmem %s2, %s225
      %s227 = smul.u32 4, %s19
      %s228 = smul.u32 2, %s20
      %p229 = scmp.lt.s32.totalorder %s18, 1
      %s230 = scalar_select %p229, %s18, 1
      %p231 = scmp.lt.s32.totalorder %s227, 3
      %s232 = scalar_select %p231, %s227, 3
      %p233 = scmp.lt.s32.totalorder %s228, 1
      %s234 = scalar_select %p233, %s228, 1
      %s235 = smul.addr %s232, 2
      %s236 = sadd.s32 %s234, %s235
      %s237 = smul.addr %s230, 8
      %s238 = sadd.s32 %s236, %s237
      %s239 = smul.addr %s238, 4
      %s240 = scalar_lea.vmem %s0, %s239
      %s241 = smul.u32 4, %s19
      %s242 = smul.u32 2, %s20
      %s243 = smul.u32 4, %s19
      %s244 = smul.u32 2, %s20
      %p245 = scmp.lt.s32.totalorder %s18, 1
      %s246 = scalar_select %p245, %s18, 1
      %p247 = scmp.lt.s32.totalorder %s243, 3
      %s248 = scalar_select %p247, %s243, 3
      %p249 = scmp.lt.s32.totalorder %s244, 1
      %s250 = scalar_select %p249, %s244, 1
      %s251 = smul.addr %s248, 2
      %s252 = sadd.s32 %s250, %s251
      %s253 = smul.addr %s246, 8
      %s254 = sadd.s32 %s252, %s253
      %s255 = scalar_lea.vmem %s1, %s254
      %s256 = smul.u32 4, %s19
      %s257 = smul.u32 2, %s20
      %s258 = smul.u32 4, %s19
      %s259 = smul.u32 2, %s20
      %p260 = scmp.lt.s32.totalorder %s18, 1
      %s261 = scalar_select %p260, %s18, 1
      %p262 = scmp.lt.s32.totalorder %s258, 3
      %s263 = scalar_select %p262, %s258, 3
      %p264 = scmp.lt.s32.totalorder %s259, 1
      %s265 = scalar_select %p264, %s259, 1
      %s266 = smul.addr %s263, 2
      %s267 = sadd.s32 %s265, %s266
      %s268 = smul.addr %s261, 8
      %s269 = sadd.s32 %s267, %s268
      %s270 = smul.addr %s269, 4
      %s271 = scalar_lea.vmem %s2, %s270
      %s272 = smul.u32 4, %s19
      %s273 = smul.u32 2, %s20
      %v274 = vld [vmem:[%s240] sm:$0x77]
      %v275 = vld [vmem:[%s240 + $0x8] sm:$0x77]
      %v276 = vld [vmem:[%s240 + $0x10] sm:$0x77]
      %v277 = vld [vmem:[%s240 + $0x18] sm:$0x77]
      %v278 = vld [vmem:[%s255] sm:$0x3]
      %v279 = vld [vmem:[%s255 + $0x2] sm:$0x3]
      %v280 = vld [vmem:[%s255 + $0x4] sm:$0x3]
      %v281 = vld [vmem:[%s255 + $0x6] sm:$0x3]
      %v286 = vlaneseq
      %v287 = vshrl.u32 %v286, 7
      %v288 = vsub.s32 0, %v287
      %v289 = vrot.slane %v278, %v288
      %v290 = vlaneseq
      %v291 = vshrl.u32 %v290, 7
      %v292 = vsub.s32 1, %v291
      %v293 = vrot.slane %v278, %v292
      %v294 = vlaneseq
      %v295 = vshrl.u32 %v294, 7
      %v296 = vsub.s32 0, %v295
      %v297 = vrot.slane %v279, %v296
      %v298 = vlaneseq
      %v299 = vshrl.u32 %v298, 7
      %v300 = vsub.s32 1, %v299
      %v301 = vrot.slane %v279, %v300
      %v302 = vlaneseq
      %v303 = vshrl.u32 %v302, 7
      %v304 = vsub.s32 0, %v303
      %v305 = vrot.slane %v280, %v304
      %v306 = vlaneseq
      %v307 = vshrl.u32 %v306, 7
      %v308 = vsub.s32 1, %v307
      %v309 = vrot.slane %v280, %v308
      %v310 = vlaneseq
      %v311 = vshrl.u32 %v310, 7
      %v312 = vsub.s32 0, %v311
      %v313 = vrot.slane %v281, %v312
      %v314 = vlaneseq
      %v315 = vshrl.u32 %v314, 7
      %v316 = vsub.s32 1, %v315
      %v317 = vrot.slane %v281, %v316
      %v318 = vcombine.low %v289, %v293
      %v319 = vcombine.low %v297, %v301
      %v320 = vcombine.low %v305, %v309
      %v321 = vcombine.low %v313, %v317
      %v326 = vmul.f32 %v274, %v318
      %v327 = vmul.f32 %v275, %v319
      %v328 = vmul.f32 %v276, %v320
      %v329 = vmul.f32 %v277, %v321
      %330 = vst [vmem:[%s271] sm:$0x77] %v326
      %331 = vst [vmem:[%s271 + $0x8] sm:$0x77] %v327
      %332 = vst [vmem:[%s271 + $0x10] sm:$0x77] %v328
      %333 = vst [vmem:[%s271 + $0x18] sm:$0x77] %v329
      %s334 = smul.u32 4, %s19
      %s335 = smul.u32 2, %s20
      %p336 = scmp.lt.s32.totalorder %s18, 1
      %s337 = scalar_select %p336, %s18, 1
      %p338 = scmp.lt.s32.totalorder %s334, 3
      %s339 = scalar_select %p338, %s334, 3
      %p340 = scmp.lt.s32.totalorder %s335, 1
      %s341 = scalar_select %p340, %s335, 1
      %s342 = smul.addr %s339, 2
      %s343 = sadd.s32 %s341, %s342
      %s344 = smul.addr %s337, 8
      %s345 = sadd.s32 %s343, %s344
      %s346 = smul.addr %s345, 4
      %s347 = scalar_lea.vmem %s2, %s346
      // Predicated region
      $region29: #{tpu_custom_call.1} parent=27 // pred_check
        %p348 = pneg %p114
      $region30: #{tpu_custom_call.1} parent=27 // pred_check_branch
        %350 = sbr.rel (%p348) target = $region32
      $region31: #{tpu_custom_call.1} parent=27 // pred_region
        %s351 = smul.u32 4, %s19
        %s352 = smul.u32 2, %s20
      $region32: #{tpu_custom_call.1} parent=27 // pred_fallthru
        _
    $region28: #{tpu_custom_call.1} parent=5 // pred_fallthru
      _
    %p353 = scmp.le.s32.totalorder 2, %s8
    // Predicated region
    $region33: #{tpu_custom_call.1} parent=5 // pred_check
      %p354 = pneg %p353
    $region34: #{tpu_custom_call.1} parent=5 // pred_check_branch
      %356 = sbr.rel (%p354) target = $region36
    $region35: #{tpu_custom_call.1} parent=5 // pred_region
      %s357 = ssub.s32 %s8, 2
      // Predicated region
      $region37: #{tpu_custom_call.1} parent=35 // pred_check
        %p358 = pneg %p120
      $region38: #{tpu_custom_call.1} parent=35 // pred_check_branch
        %360 = sbr.rel (%p358) target = $region40
      $region39: #{tpu_custom_call.1} parent=35 // pred_region
        %s361 = smul.u32 4, %s22
        %s362 = smul.u32 2, %s23
        %p363 = scmp.lt.s32.totalorder %s21, 1
        %s364 = scalar_select %p363, %s21, 1
        %p365 = scmp.lt.s32.totalorder %s361, 3
        %s366 = scalar_select %p365, %s361, 3
        %p367 = scmp.lt.s32.totalorder %s362, 1
        %s368 = scalar_select %p367, %s362, 1
        %s369 = smul.addr %s366, 2
        %s370 = sadd.s32 %s368, %s369
        %s371 = smul.addr %s364, 8
        %s372 = sadd.s32 %s370, %s371
        %s373 = smul.addr %s372, 4
        %s374 = scalar_lea.vmem %s2, %s373
      $region40: #{tpu_custom_call.1} parent=35 // pred_fallthru
        _
    $region36: #{tpu_custom_call.1} parent=5 // pred_fallthru
      _
  $region6: #{tpu_custom_call.1} parent=0 // loop_footer
    %s12 = sadd.s32 1, %s8
  $region7: #{tpu_custom_call.1} parent=0 // loop_footer_branch
    %7 = sbr.rel target = $region3
  $region8: #{tpu_custom_call.1} parent=0 // loop_exit
    _

</llo_original>
